<compile_context>
chip_gen: v5e
topology: v5e:2x2
jax: 0.10.0
libtpu: 0.0.40
codegen_flags: <defaults>
</compile_context>

<pallas_src>
import functools

import jax
import jax.numpy as jnp
from jax import lax
from jax.experimental import pallas as pl
from jax.experimental.pallas import tpu as pltpu

_NORMALIZE_EPS = 1e-12   # F.normalize default eps
_COS_EPS = 1e-8          # F.cosine_similarity default eps


def _cosine_partial_kernel(p_ref, t_ref, o_ref, spp_ref, stt_ref, spt_ref, *,
                           n_rows, n_cols, tile_n, tile_d):
    """Accumulate per-row dot products over D tiles; finalize cos on last tile."""
    ni = pl.program_id(0)
    di = pl.program_id(1)

    @pl.when(di == 0)
    def _init():
        spp_ref[...] = jnp.zeros_like(spp_ref)
        stt_ref[...] = jnp.zeros_like(stt_ref)
        spt_ref[...] = jnp.zeros_like(spt_ref)

    p = p_ref[...].astype(jnp.float32)
    t = t_ref[...].astype(jnp.float32)

    # Mask ragged last D tile (only emitted when D % tile_d != 0).
    if n_cols % tile_d != 0:
        col = (lax.broadcasted_iota(jnp.int32, (tile_n, tile_d), 1)
               + di * tile_d)
        valid = col < n_cols
        p = jnp.where(valid, p, 0.0)
        t = jnp.where(valid, t, 0.0)

    # Three streaming multiply + lane-reduce passes; no normalized tensors.
    spp_ref[...] += jnp.sum(p * p, axis=1, keepdims=True)   # (tile_n, 1)
    stt_ref[...] += jnp.sum(t * t, axis=1, keepdims=True)
    spt_ref[...] += jnp.sum(p * t, axis=1, keepdims=True)

    @pl.when(di == pl.num_programs(1) - 1)
    def _finalize():
        s_pp = spp_ref[...]
        s_tt = stt_ref[...]
        s_pt = spt_ref[...]

        # F.normalize(p=2, dim=1) folded: x / max(||x||, eps)
        norm_p = jnp.maximum(jnp.sqrt(s_pp), _NORMALIZE_EPS)
        norm_t = jnp.maximum(jnp.sqrt(s_tt), _NORMALIZE_EPS)

        # F.cosine_similarity(pn, tn, dim=1): w12 / sqrt(max(w1*w2, eps^2))
        w12 = s_pt / (norm_p * norm_t)
        w1 = s_pp / (norm_p * norm_p)
        w2 = s_tt / (norm_t * norm_t)
        cos = w12 * lax.rsqrt(jnp.maximum(w1 * w2, _COS_EPS * _COS_EPS))

        # Mask ragged last N tile so the mean divides by the true N
        # (only emitted when N % tile_n != 0).
        if n_rows % tile_n != 0:
            row = (lax.broadcasted_iota(jnp.int32, (tile_n, 1), 0)
                   + ni * tile_n)
            cos = jnp.where(row < n_rows, cos, 0.0)

        # Lane-dense (128-wide) unmasked store of the per-tile partial sum.
        o_ref[...] = jnp.full((1, 1, 128), jnp.sum(cos), dtype=jnp.float32)


def _choose_tiles(n, d, itemsize, row_mult):
    """Pick (tile_n, tile_d) so 2 inputs x 2 buffers stay well inside scoped VMEM."""
    budget = 4 * 1024 * 1024                 # bytes per input block (~16 MiB total)
    bytes_per_row = max(1, d * itemsize)
    if n * bytes_per_row <= budget:
        return n, d                          # whole problem in one block
    if row_mult * bytes_per_row <= budget:
        # Tile only N, keep full D.
        tn = (budget // bytes_per_row // row_mult) * row_mult
        tn = min(max(tn, row_mult), 2048)
        return tn, d
    # D too wide even for a minimal row tile: tile D as well (accumulator path).
    tn = row_mult if n >= row_mult else n
    td = (budget // (tn * itemsize) // 128) * 128
    td = max(128, min(td, d))
    return tn, td


def cosine_similarity_loss(predicted, target, *, tile_n=None, tile_d=None):
    """Pallas implementation of CosineSimilarityLoss.forward for (N, D) inputs."""
    assert predicted.shape == target.shape
    assert predicted.ndim == 2
    n, d = predicted.shape
    itemsize = jnp.dtype(predicted.dtype).itemsize
    row_mult = 8 if itemsize >= 4 else (16 if itemsize == 2 else 32)

    auto_tn, auto_td = _choose_tiles(n, d, itemsize, row_mult)
    tn = auto_tn if tile_n is None else tile_n
    td = auto_td if tile_d is None else tile_d

    # Sanitize tile sizes against the (8, 128) block constraint.
    if tn >= n:
        tn = n                                  # block equals full dim: always legal
    else:
        tn = max(row_mult, (tn // row_mult) * row_mult)
    if td >= d:
        td = d
    else:
        td = max(128, (td // 128) * 128)

    num_tiles_n = pl.cdiv(n, tn)
    num_tiles_d = pl.cdiv(d, td)

    kernel = functools.partial(
        _cosine_partial_kernel, n_rows=n, n_cols=d, tile_n=tn, tile_d=td)

    partials = pl.pallas_call(
        kernel,
        out_shape=jax.ShapeDtypeStruct((num_tiles_n, 1, 128), jnp.float32),
        grid_spec=pltpu.PrefetchScalarGridSpec(
            num_scalar_prefetch=0,
            grid=(num_tiles_n, num_tiles_d),
            in_specs=[
                pl.BlockSpec((tn, td), lambda i, j: (i, j)),
                pl.BlockSpec((tn, td), lambda i, j: (i, j)),
            ],
            out_specs=pl.BlockSpec((1, 1, 128), lambda i, j: (i, 0, 0)),
            scratch_shapes=[
                pltpu.VMEM((tn, 1), jnp.float32),   # s_pp accumulator
                pltpu.VMEM((tn, 1), jnp.float32),   # s_tt accumulator
                pltpu.VMEM((tn, 1), jnp.float32),   # s_pt accumulator
            ],
        ),
        compiler_params=pltpu.CompilerParams(
            dimension_semantics=("parallel", "arbitrary"),
            vmem_limit_bytes=32 * 1024 * 1024,
        ),
    )(predicted, target)

    # Tiny final reduction + 1 - mean in plain JAX.
    return 1.0 - jnp.sum(partials[:, 0, 0]) / n


def _reference(predicted, target):
    p = predicted.astype(jnp.float32)
    t = target.astype(jnp.float32)
    pn = p / jnp.maximum(
        jnp.linalg.norm(p, axis=1, keepdims=True), _NORMALIZE_EPS)
    tn = t / jnp.maximum(
        jnp.linalg.norm(t, axis=1, keepdims=True), _NORMALIZE_EPS)
    w12 = jnp.sum(pn * tn, axis=1)
    w1 = jnp.sum(pn * pn, axis=1)
    w2 = jnp.sum(tn * tn, axis=1)
    cos = w12 / jnp.sqrt(jnp.maximum(w1 * w2, _COS_EPS * _COS_EPS))
    return 1.0 - jnp.mean(cos)


if __name__ == "__main__":
    key = jax.random.PRNGKey(0)
    k1, k2, k3, k4, k5, k6 = jax.random.split(key, 6)

    # Canonical small shape: batch=8, hidden=32 (single full-block fast path).
    N, D = 8, 32
    predicted = jax.random.normal(k1, (N, D), dtype=jnp.float32)
    target = jax.random.normal(k2, (N, D), dtype=jnp.float32)
    loss = cosine_similarity_loss(predicted, target)
    jax.block_until_ready(loss)
    ref = _reference(predicted, target)
    assert jnp.allclose(loss, ref, atol=1e-5, rtol=1e-5), (loss, ref)

    # Tiled-N path with a ragged last N tile (masking + parallel grid axis).
    N2, D2 = 20, 32
    p2 = jax.random.normal(k3, (N2, D2), dtype=jnp.float32)
    t2 = jax.random.normal(k4, (N2, D2), dtype=jnp.float32)
    loss2 = cosine_similarity_loss(p2, t2, tile_n=8)
    jax.block_until_ready(loss2)
    ref2 = _reference(p2, t2)
    assert jnp.allclose(loss2, ref2, atol=1e-5, rtol=1e-5), (loss2, ref2)

    # Tiled-D accumulator path with a ragged last D tile (scratch carry + mask).
    N3, D3 = 16, 160
    p3 = jax.random.normal(k5, (N3, D3), dtype=jnp.float32)
    t3 = jax.random.normal(k6, (N3, D3), dtype=jnp.float32)
    loss3 = cosine_similarity_loss(p3, t3, tile_n=8, tile_d=128)
    jax.block_until_ready(loss3)
    ref3 = _reference(p3, t3)
    assert jnp.allclose(loss3, ref3, atol=1e-5, rtol=1e-5), (loss3, ref3)

    print("KERNEL_OK")
</pallas_src>

<mosaic_0001>
module attributes {stable_mosaic.version = 11 : i64} {
  func.func @_cosine_partial_kernel(%arg0: i32, %arg1: i32, %arg2: memref<8x32xf32, #tpu.memory_space<vmem>>, %arg3: memref<8x32xf32, #tpu.memory_space<vmem>>, %arg4: memref<1x1x128xf32, #tpu.memory_space<vmem>>, %arg5: memref<8x1xf32, #tpu.memory_space<vmem>>, %arg6: memref<8x1xf32, #tpu.memory_space<vmem>>, %arg7: memref<8x1xf32, #tpu.memory_space<vmem>>) attributes {dimension_semantics = [#tpu.dimension_semantics<parallel>, #tpu.dimension_semantics<arbitrary>], iteration_bounds = array<i64: 1, 1>, scalar_prefetch = 0 : i64, scratch_operands = 3 : i64, tpu.core_type = #tpu.core_type<tc>, window_params = [{transform_indices = @transform_0, window_bounds = array<i64: 8, 32>}, {transform_indices = @transform_1, window_bounds = array<i64: 8, 32>}, {transform_indices = @transform_2, window_bounds = array<i64: 1, 1, 128>}]} {
    %c0_i32 = arith.constant 0 : i32
    %0 = arith.cmpi eq, %arg1, %c0_i32 : i32
    %1 = arith.extui %0 : i1 to i32
    %c0_i32_0 = arith.constant 0 : i32
    %2 = arith.cmpi ne, %1, %c0_i32_0 : i32
    scf.if %2 {
      %cst_20 = arith.constant 0.000000e+00 : f32
      %26 = vector.broadcast %cst_20 : f32 to vector<8x1xf32>
      %c0_21 = arith.constant 0 : index
      %c0_22 = arith.constant 0 : index
      %27 = vector.load %arg5[%c0_21, %c0_22] : memref<8x1xf32, #tpu.memory_space<vmem>>, vector<8x1xf32>
      tpu.vector_store %arg5[%c0_21, %c0_22], %26 {strides = array<i32>} : memref<8x1xf32, #tpu.memory_space<vmem>>, vector<8x1xf32>,
      %cst_23 = arith.constant 0.000000e+00 : f32
      %28 = vector.broadcast %cst_23 : f32 to vector<8x1xf32>
      %c0_24 = arith.constant 0 : index
      %c0_25 = arith.constant 0 : index
      %29 = vector.load %arg6[%c0_24, %c0_25] : memref<8x1xf32, #tpu.memory_space<vmem>>, vector<8x1xf32>
      tpu.vector_store %arg6[%c0_24, %c0_25], %28 {strides = array<i32>} : memref<8x1xf32, #tpu.memory_space<vmem>>, vector<8x1xf32>,
      %cst_26 = arith.constant 0.000000e+00 : f32
      %30 = vector.broadcast %cst_26 : f32 to vector<8x1xf32>
      %c0_27 = arith.constant 0 : index
      %c0_28 = arith.constant 0 : index
      %31 = vector.load %arg7[%c0_27, %c0_28] : memref<8x1xf32, #tpu.memory_space<vmem>>, vector<8x1xf32>
      tpu.vector_store %arg7[%c0_27, %c0_28], %30 {strides = array<i32>} : memref<8x1xf32, #tpu.memory_space<vmem>>, vector<8x1xf32>,
    } else {
    }
    %c0 = arith.constant 0 : index
    %c0_1 = arith.constant 0 : index
    %3 = vector.load %arg2[%c0, %c0_1] : memref<8x32xf32, #tpu.memory_space<vmem>>, vector<8x32xf32>
    %c0_2 = arith.constant 0 : index
    %c0_3 = arith.constant 0 : index
    %4 = vector.load %arg3[%c0_2, %c0_3] : memref<8x32xf32, #tpu.memory_space<vmem>>, vector<8x32xf32>
    %c0_4 = arith.constant 0 : index
    %c0_5 = arith.constant 0 : index
    %5 = vector.load %arg5[%c0_4, %c0_5] : memref<8x1xf32, #tpu.memory_space<vmem>>, vector<8x1xf32>
    %6 = arith.mulf %3, %3 : vector<8x32xf32>
    %cst = arith.constant dense<0.000000e+00> : vector<8xf32>
    %7 = vector.multi_reduction <add>, %6, %cst [1] : vector<8x32xf32> to vector<8xf32>
    %8 = vector.shape_cast %7 : vector<8xf32> to vector<8x1xf32>
    %9 = arith.addf %5, %8 : vector<8x1xf32>
    %c0_6 = arith.constant 0 : index
    %c0_7 = arith.constant 0 : index
    %10 = vector.load %arg5[%c0_6, %c0_7] : memref<8x1xf32, #tpu.memory_space<vmem>>, vector<8x1xf32>
    tpu.vector_store %arg5[%c0_6, %c0_7], %9 {strides = array<i32>} : memref<8x1xf32, #tpu.memory_space<vmem>>, vector<8x1xf32>,
    %c0_8 = arith.constant 0 : index
    %c0_9 = arith.constant 0 : index
    %11 = vector.load %arg6[%c0_8, %c0_9] : memref<8x1xf32, #tpu.memory_space<vmem>>, vector<8x1xf32>
    %12 = arith.mulf %4, %4 : vector<8x32xf32>
    %cst_10 = arith.constant dense<0.000000e+00> : vector<8xf32>
    %13 = vector.multi_reduction <add>, %12, %cst_10 [1] : vector<8x32xf32> to vector<8xf32>
    %14 = vector.shape_cast %13 : vector<8xf32> to vector<8x1xf32>
    %15 = arith.addf %11, %14 : vector<8x1xf32>
    %c0_11 = arith.constant 0 : index
    %c0_12 = arith.constant 0 : index
    %16 = vector.load %arg6[%c0_11, %c0_12] : memref<8x1xf32, #tpu.memory_space<vmem>>, vector<8x1xf32>
    tpu.vector_store %arg6[%c0_11, %c0_12], %15 {strides = array<i32>} : memref<8x1xf32, #tpu.memory_space<vmem>>, vector<8x1xf32>,
    %c0_13 = arith.constant 0 : index
    %c0_14 = arith.constant 0 : index
    %17 = vector.load %arg7[%c0_13, %c0_14] : memref<8x1xf32, #tpu.memory_space<vmem>>, vector<8x1xf32>
    %18 = arith.mulf %3, %4 : vector<8x32xf32>
    %cst_15 = arith.constant dense<0.000000e+00> : vector<8xf32>
    %19 = vector.multi_reduction <add>, %18, %cst_15 [1] : vector<8x32xf32> to vector<8xf32>
    %20 = vector.shape_cast %19 : vector<8xf32> to vector<8x1xf32>
    %21 = arith.addf %17, %20 : vector<8x1xf32>
    %c0_16 = arith.constant 0 : index
    %c0_17 = arith.constant 0 : index
    %22 = vector.load %arg7[%c0_16, %c0_17] : memref<8x1xf32, #tpu.memory_space<vmem>>, vector<8x1xf32>
    tpu.vector_store %arg7[%c0_16, %c0_17], %21 {strides = array<i32>} : memref<8x1xf32, #tpu.memory_space<vmem>>, vector<8x1xf32>,
    %c0_i32_18 = arith.constant 0 : i32
    %23 = arith.cmpi eq, %arg1, %c0_i32_18 : i32
    %24 = arith.extui %23 : i1 to i32
    %c0_i32_19 = arith.constant 0 : i32
    %25 = arith.cmpi ne, %24, %c0_i32_19 : i32
    scf.if %25 {
      %c0_20 = arith.constant 0 : index
      %c0_21 = arith.constant 0 : index
      %26 = vector.load %arg5[%c0_20, %c0_21] : memref<8x1xf32, #tpu.memory_space<vmem>>, vector<8x1xf32>
      %c0_22 = arith.constant 0 : index
      %c0_23 = arith.constant 0 : index
      %27 = vector.load %arg6[%c0_22, %c0_23] : memref<8x1xf32, #tpu.memory_space<vmem>>, vector<8x1xf32>
      %c0_24 = arith.constant 0 : index
      %c0_25 = arith.constant 0 : index
      %28 = vector.load %arg7[%c0_24, %c0_25] : memref<8x1xf32, #tpu.memory_space<vmem>>, vector<8x1xf32>
      %29 = math.sqrt %26 : vector<8x1xf32>
      %cst_26 = arith.constant 9.99999996E-13 : f32
      %30 = vector.broadcast %cst_26 : f32 to vector<8x1xf32>
      %31 = arith.maximumf %29, %30 : vector<8x1xf32>
      %32 = math.sqrt %27 : vector<8x1xf32>
      %cst_27 = arith.constant 9.99999996E-13 : f32
      %33 = vector.broadcast %cst_27 : f32 to vector<8x1xf32>
      %34 = arith.maximumf %32, %33 : vector<8x1xf32>
      %35 = arith.mulf %31, %34 : vector<8x1xf32>
      %36 = arith.divf %28, %35 : vector<8x1xf32>
      %37 = arith.mulf %31, %31 : vector<8x1xf32>
      %38 = arith.divf %26, %37 : vector<8x1xf32>
      %39 = arith.mulf %34, %34 : vector<8x1xf32>
      %40 = arith.divf %27, %39 : vector<8x1xf32>
      %41 = arith.mulf %38, %40 : vector<8x1xf32>
      %cst_28 = arith.constant 1.000000e-16 : f32
      %42 = vector.broadcast %cst_28 : f32 to vector<8x1xf32>
      %43 = arith.maximumf %41, %42 : vector<8x1xf32>
      %44 = math.rsqrt %43 : vector<8x1xf32>
      %45 = arith.mulf %36, %44 : vector<8x1xf32>
      %46 = vector.shape_cast %45 : vector<8x1xf32> to vector<1x8x1xf32>
      %cst_29 = arith.constant dense<0.000000e+00> : vector<1xf32>
      %47 = vector.multi_reduction <add>, %46, %cst_29 [1, 2] : vector<1x8x1xf32> to vector<1xf32>
      %48 = vector.shape_cast %47 : vector<1xf32> to vector<1x1x1xf32>
      %49 = vector.extract %48[0, 0, 0] : f32 from vector<1x1x1xf32>
      %50 = vector.broadcast %49 : f32 to vector<1x1x128xf32>
      %c0_30 = arith.constant 0 : index
      %c0_31 = arith.constant 0 : index
      %c0_32 = arith.constant 0 : index
      %51 = vector.load %arg4[%c0_30, %c0_31, %c0_32] : memref<1x1x128xf32, #tpu.memory_space<vmem>>, vector<1x1x128xf32>
      tpu.vector_store %arg4[%c0_30, %c0_31, %c0_32], %50 {strides = array<i32>} : memref<1x1x128xf32, #tpu.memory_space<vmem>>, vector<1x1x128xf32>,
    } else {
    }
    return
  }
  func.func @transform_0(%arg0: i32, %arg1: i32) -> (i32, i32) {
    %c0_i32 = arith.constant 0 : i32
    return %arg0, %arg1 : i32, i32
  }
  func.func @transform_1(%arg0: i32, %arg1: i32) -> (i32, i32) {
    %c0_i32 = arith.constant 0 : i32
    return %arg0, %arg1 : i32, i32
  }
  func.func @transform_2(%arg0: i32, %arg1: i32) -> (i32, i32, i32) {
    %c0_i32 = arith.constant 0 : i32
    %c0_i32_0 = arith.constant 0 : i32
    %c0_i32_1 = arith.constant 0 : i32
    return %arg0, %c0_i32, %c0_i32_0 : i32, i32, i32
  }
}

</mosaic_0001>

<llo_original>
// kernel: tpu_custom_call.1
$region0: #{tpu_custom_call.1}
  #allocation0 [shape = 'u32[]', space=smem, size = 0x4, offset = 0x4, fixed_abs, tag = 'smem constant byte address 0x4 - core index']
  #allocation1 [shape = 'u32[72,128]{1,0:T(1,128)}', space=vmem, size = 0x9000, scoped, tag = 'internal scratch']
  #allocation2 [shape = 'f32[8,1]{1,0:T(8,128)}', space=vmem, size = 0x1000, scoped, tag = 'scratch operand']
  #allocation3 [shape = 'f32[8,1]{1,0:T(8,128)}', space=vmem, size = 0x1000, scoped, tag = 'scratch operand']
  #allocation4 [shape = 'f32[8,1]{1,0:T(8,128)}', space=vmem, size = 0x1000, scoped, tag = 'scratch operand']
  %s0 = inlined_call_operand.hbm [shape: f32[8,32], index: 0, kind: input, shape index: {}]
  %s1 = inlined_call_operand.hbm [shape: f32[8,32], index: 1, kind: input, shape index: {}]
  %s2 = inlined_call_operand.hbm [shape: f32[1,1,128], index: 2, kind: output, shape index: {}]
  %s3 = sld [smem:[#allocation0]]
  $region34: #{tpu_custom_call.1} parent=0
    _
  %s5 = ssub.s32 1, %s3
  %s6 = scalar_select 0, %s5, %s3
  $region1: #{tpu_custom_call.1} parent=0
    #allocation5 [shape = 'u8[4096]{0}', space=vmem, size = 0x1000, scoped, tag = 'input window, operand 0, single buffered']
    #allocation6 [shape = 's32[1]{0}', space=sflag, size = 0x4, scoped, tag = 'scoped memory for tpu_custom_call.1']
    #allocation7 [shape = 's32[1]{0}', space=sflag, size = 0x4, scoped, tag = 'scoped memory for tpu_custom_call.1']
    #allocation8 [shape = 'u8[4096]{0}', space=vmem, size = 0x1000, scoped, tag = 'input window, operand 1, single buffered']
    #allocation9 [shape = 's32[1]{0}', space=sflag, size = 0x4, scoped, tag = 'scoped memory for tpu_custom_call.1']
    #allocation10 [shape = 'u8[512]{0}', space=vmem, size = 0x400, scoped, tag = 'output window, operand 0, single buffered']
    %7 = vsyncpa [#allocation6], 0
    %8 = vsyncpa [#allocation9], 0
    %9 = vsyncpa [#allocation7], 0
    // Predicated region
    $region2: #{tpu_custom_call.1} parent=1 // pred_check
      _
    $region3: #{tpu_custom_call.1} parent=1 // pred_check_branch
      %11 = sbr.rel (0) target = $region5
    $region4: #{tpu_custom_call.1} parent=1 // pred_region
      %13 = vsyncadd [#allocation6], 0
      %s15 = sshll.u32 %s0, 4
      %s16 = int_to_ptr.hbm [resolvable:$true] %s15
      %s17 = sshll.u32 [#allocation5], 4
      %s18 = int_to_ptr.vmem [resolvable:$true] %s17
      %20 = dma.hbm_to_vmem [thread:$0]  %s16, 128, %s18, [#allocation6]
    $region5: #{tpu_custom_call.1} parent=1 // pred_fallthru
      _
    // Predicated region
    $region6: #{tpu_custom_call.1} parent=1 // pred_check
      _
    $region7: #{tpu_custom_call.1} parent=1 // pred_check_branch
      %22 = sbr.rel (0) target = $region9
    $region8: #{tpu_custom_call.1} parent=1 // pred_region
      %24 = vsyncadd [#allocation9], 0
      %s26 = sshll.u32 %s1, 4
      %s27 = int_to_ptr.hbm [resolvable:$true] %s26
      %s28 = sshll.u32 [#allocation8], 4
      %s29 = int_to_ptr.vmem [resolvable:$true] %s28
      %31 = dma.hbm_to_vmem [thread:$0]  %s27, 128, %s29, [#allocation9]
    $region9: #{tpu_custom_call.1} parent=1 // pred_fallthru
      _
    // Predicated region
    $region10: #{tpu_custom_call.1} parent=1 // pred_check
      _
    $region11: #{tpu_custom_call.1} parent=1 // pred_check_branch
      %33 = sbr.rel (0) target = $region13
    $region12: #{tpu_custom_call.1} parent=1 // pred_region
      %35 = dma.done [#allocation6], 128
    $region13: #{tpu_custom_call.1} parent=1 // pred_fallthru
      _
    // Predicated region
    $region14: #{tpu_custom_call.1} parent=1 // pred_check
      _
    $region15: #{tpu_custom_call.1} parent=1 // pred_check_branch
      %37 = sbr.rel (0) target = $region17
    $region16: #{tpu_custom_call.1} parent=1 // pred_region
      %39 = dma.done [#allocation9], 128
    $region17: #{tpu_custom_call.1} parent=1 // pred_fallthru
      _
    %p40 = scmp.eq.s32.totalorder 0, 0
    // Predicated region
    $region18: #{tpu_custom_call.1} parent=1 // pred_check
      %p41 = pneg %p40
    $region19: #{tpu_custom_call.1} parent=1 // pred_check_branch
      %43 = sbr.rel (%p41) target = $region21
    $region20: #{tpu_custom_call.1} parent=1 // pred_region
      %vm44 = vcmask 7168
      %45 = vst.msk [vmem:[#allocation2] sm:$0xff] %vm44, 0.0
      %46 = vst.msk [vmem:[#allocation3] sm:$0xff] %vm44, 0.0
      %47 = vst.msk [vmem:[#allocation4] sm:$0xff] %vm44, 0.0
    $region21: #{tpu_custom_call.1} parent=1 // pred_fallthru
      _
    %v48 = vld [vmem:[#allocation5] sm:$0xff]
    %v49 = vld [vmem:[#allocation8] sm:$0xff]
    %v50 = vld [vmem:[#allocation2] sm:$0xff]
    %v51 = vmul.f32 %v48, %v48
    %vm52 = vcmask 261120
    %v53 = vsel %vm52, %v51, 0.0
    %54 = vadd.xlane.f32.xlu0 %v53
    %v55 = vpop.xlane.xlu0 %54
    %v56 = vadd.f32 %v50, %v55
    %vm57 = vcmask 7168
    %58 = vst.msk [vmem:[#allocation2] sm:$0xff] %vm57, %v56
    %v59 = vld [vmem:[#allocation3] sm:$0xff]
    %v60 = vmul.f32 %v49, %v49
    %v61 = vsel %vm52, %v60, 0.0
    %62 = vadd.xlane.f32.xlu0 %v61
    %v63 = vpop.xlane.xlu0 %62
    %v64 = vadd.f32 %v59, %v63
    %65 = vst.msk [vmem:[#allocation3] sm:$0xff] %vm57, %v64
    %v66 = vld [vmem:[#allocation4] sm:$0xff]
    %v67 = vmul.f32 %v48, %v49
    %v68 = vsel %vm52, %v67, 0.0
    %69 = vadd.xlane.f32.xlu0 %v68
    %v70 = vpop.xlane.xlu0 %69
    %v71 = vadd.f32 %v66, %v70
    %72 = vst.msk [vmem:[#allocation4] sm:$0xff] %vm57, %v71
    // Predicated region
    $region22: #{tpu_custom_call.1} parent=1 // pred_check
      %p73 = pneg %p40
    $region23: #{tpu_custom_call.1} parent=1 // pred_check_branch
      %75 = sbr.rel (%p73) target = $region25
    $region24: #{tpu_custom_call.1} parent=1 // pred_region
      %v76 = vld [vmem:[#allocation2] sm:$0xff]
      %v77 = vld [vmem:[#allocation3] sm:$0xff]
      %v78 = vld [vmem:[#allocation4] sm:$0xff]
      %v79 = vrsqrt.pop %v76
      %v80 = vmul.f32 %v79, %v76
      %v81 = vmul.f32 %v80, %v79
      %v82 = vmul.f32 0.5, %v81
      %v83 = vsub.f32 1.5, %v82
      %v84 = vmul.f32 %v79, %v83
      %v85 = vmul.f32 %v76, %v84
      %vm86 = vcmp.eq.f32.partialorder %v76, inf
      %v87 = vsel %vm86, %v76, %v85
      %vm88 = vcmp.eq.f32.partialorder %v76, 0.0
      %v89 = vand.u32 %v76, 2147483648
      %v90 = vsel %vm88, %v89, %v87
      %v91 = vmax.f32 %v90, 1e-12
      %v92 = vrsqrt.pop %v77
      %v93 = vmul.f32 %v92, %v77
      %v94 = vmul.f32 %v93, %v92
      %v95 = vmul.f32 0.5, %v94
      %v96 = vsub.f32 1.5, %v95
      %v97 = vmul.f32 %v92, %v96
      %v98 = vmul.f32 %v77, %v97
      %vm99 = vcmp.eq.f32.partialorder %v77, inf
      %v100 = vsel %vm99, %v77, %v98
      %vm101 = vcmp.eq.f32.partialorder %v77, 0.0
      %v102 = vand.u32 %v77, 2147483648
      %v103 = vsel %vm101, %v102, %v100
      %v104 = vmax.f32 %v103, 1e-12
      %v105 = vmul.f32 %v91, %v104
      %v106 = vrcp.pop %v105
      %v107 = vmul.f32 %v105, %v106
      %v108 = vsub.f32 1.0, %v107
      %v109 = vmul.f32 %v106, %v108
      %v110 = vadd.f32 %v106, %v109
      %vm111 = vweird.f32 %v105
      %vm112 = vweird.f32 %v106
      %vm113 = vmor %vm111, %vm112
      %v114 = vsel %vm113, %v106, %v110
      %v115 = vand.u32 2147483647, %v105
      %vm116 = vcmp.eq.f32.partialorder %v115, 8.507059e+37
      %v117 = vand.u32 %v105, 2147483648
      %v118 = vor.u32 1.1754944e-38, %v117
      %v119 = vsel %vm116, %v118, %v114
      %v120 = vmul.f32 %v78, %v119
      %v121 = vmul.f32 %v91, %v91
      %v122 = vrcp.pop %v121
      %v123 = vmul.f32 %v121, %v122
      %v124 = vsub.f32 1.0, %v123
      %v125 = vmul.f32 %v122, %v124
      %v126 = vadd.f32 %v122, %v125
      %vm127 = vweird.f32 %v121
      %vm128 = vweird.f32 %v122
      %vm129 = vmor %vm127, %vm128
      %v130 = vsel %vm129, %v122, %v126
      %v131 = vand.u32 2147483647, %v121
      %vm132 = vcmp.eq.f32.partialorder %v131, 8.507059e+37
      %v133 = vand.u32 %v121, 2147483648
      %v134 = vor.u32 1.1754944e-38, %v133
      %v135 = vsel %vm132, %v134, %v130
      %v136 = vmul.f32 %v76, %v135
      %v137 = vmul.f32 %v104, %v104
      %v138 = vrcp.pop %v137
      %v139 = vmul.f32 %v137, %v138
      %v140 = vsub.f32 1.0, %v139
      %v141 = vmul.f32 %v138, %v140
      %v142 = vadd.f32 %v138, %v141
      %vm143 = vweird.f32 %v137
      %vm144 = vweird.f32 %v138
      %vm145 = vmor %vm143, %vm144
      %v146 = vsel %vm145, %v138, %v142
      %v147 = vand.u32 2147483647, %v137
      %vm148 = vcmp.eq.f32.partialorder %v147, 8.507059e+37
      %v149 = vand.u32 %v137, 2147483648
      %v150 = vor.u32 1.1754944e-38, %v149
      %v151 = vsel %vm148, %v150, %v146
      %v152 = vmul.f32 %v77, %v151
      %v153 = vmul.f32 %v136, %v152
      %v154 = vmax.f32 %v153, 1e-16
      %v155 = vrsqrt.pop %v154
      %v156 = vmul.f32 %v155, %v154
      %v157 = vmul.f32 %v156, %v155
      %v158 = vmul.f32 0.5, %v157
      %v159 = vsub.f32 1.5, %v158
      %v160 = vmul.f32 %v155, %v159
      %vm161 = vweird.f32 %v154
      %vm162 = vweird.f32 %v155
      %vm163 = vmor %vm161, %vm162
      %v164 = vsel %vm163, %v155, %v160
      %v165 = vmul.f32 %v120, %v164
      %v166 = vsel %vm57, %v165, 0.0
      %167 = vadd.xlane.f32.xlu0 %v166
      %v168 = vpop.xlane.xlu0 %167
      %v169 = vrot.slane %v168, 4
      %v170 = vadd.f32 %v168, %v169
      %v171 = vrot.slane %v170, 2
      %v172 = vadd.f32 %v170, %v171
      %v173 = vrot.slane %v172, 1
      %v174 = vadd.f32 %v172, %v173
      %s175 = vtos %v174
      %v176 = vstv %s175
      %177 = vst [vmem:[#allocation10] sm:$0x1] %v176
    $region25: #{tpu_custom_call.1} parent=1 // pred_fallthru
      _
    // Predicated region
    $region26: #{tpu_custom_call.1} parent=1 // pred_check
      _
    $region27: #{tpu_custom_call.1} parent=1 // pred_check_branch
      %179 = sbr.rel (0) target = $region29
    $region28: #{tpu_custom_call.1} parent=1 // pred_region
      %181 = vsyncadd [#allocation7], 0
      %s183 = sshll.u32 [#allocation10], 4
      %s184 = int_to_ptr.vmem [resolvable:$true] %s183
      %s185 = sshll.u32 %s2, 4
      %s186 = int_to_ptr.hbm [resolvable:$true] %s185
      %188 = dma.vmem_to_hbm [thread:$0]  %s184, 16, %s186, [#allocation7]
    $region29: #{tpu_custom_call.1} parent=1 // pred_fallthru
      _
    // Predicated region
    $region30: #{tpu_custom_call.1} parent=1 // pred_check
      _
    $region31: #{tpu_custom_call.1} parent=1 // pred_check_branch
      %190 = sbr.rel (0) target = $region33
    $region32: #{tpu_custom_call.1} parent=1 // pred_region
      %192 = dma.done [#allocation7], 16
    $region33: #{tpu_custom_call.1} parent=1 // pred_fallthru
      _
    %193 = vsyncpa [#allocation6], 1
    %194 = vsyncpa [#allocation9], 1
    %195 = vsyncpa [#allocation7], 1

</llo_original>
